<compile_context>
chip_gen: v7x
topology: tpu7x:2x2x1
jax: 0.10.0
libtpu: 0.0.40
codegen_flags: <defaults>
</compile_context>

<pallas_src>
from functools import partial

import jax
import jax.numpy as jnp
from jax.experimental import pallas as pl
from jax.experimental.pallas import tpu as pltpu

GAMMA = 2  # fixed (module default); implemented as an explicit square below.


def _round_up(x, m):
    return ((x + m - 1) // m) * m


def _focal_loss_kernel(logits_ref, target_ref, out_ref, *, n_rows):
    x = logits_ref[...].astype(jnp.float32)                   # (TILE_N, C)
    tn, c = x.shape

    # Numerically-stable log-sum-exp along the class (lane) axis.
    m = jnp.max(x, axis=1, keepdims=True)                     # (TILE_N, 1)
    shifted = x - m
    lse = jnp.log(jnp.sum(jnp.exp(shifted), axis=1, keepdims=True))

    # Gather shifted[i, target[i]] BEFORE any focal math: broadcast (1, C) iota
    # against the (TILE_N, 1) targets (no full (TILE_N, C) iota materialized).
    cls_ids = jax.lax.broadcasted_iota(jnp.int32, (1, c), 1)
    tgt = target_ref[...]                                      # (TILE_N, 1) int32
    shifted_t = jnp.sum(jnp.where(cls_ids == tgt, shifted, 0.0),
                        axis=1, keepdims=True)                 # (TILE_N, 1)

    # Per-row focal term on the picked column only.
    logpt_t = shifted_t - lse                                  # (TILE_N, 1)
    pt_t = jnp.exp(logpt_t)
    omp = 1.0 - pt_t
    focal_t = omp * omp * logpt_t                              # gamma=2 -> explicit square

    # Mask rows past the true batch size (last tile may be partial; its rows
    # hold undefined data, so mask AFTER the math to select any NaN/inf away).
    row_ids = pl.program_id(0) * tn + jax.lax.broadcasted_iota(jnp.int32, (tn, 1), 0)
    contrib = jnp.where(row_ids < n_rows, focal_t, 0.0)

    # Lane-dense (1, 1, 128) write; wrapper reads [:, 0, 0].
    out_ref[...] = jnp.full(out_ref.shape, jnp.sum(contrib), dtype=jnp.float32)


def focal_loss(logits, target, tile_n=None):
    """logits: (N, C) float (f32 or bf16); target: (N,) int class indices.

    Returns the scalar focal loss (gamma=2, weight=None, mean reduction).
    """
    n, c = logits.shape
    itemsize = jnp.dtype(logits.dtype).itemsize
    # Native sublane packing: 8 rows for 32-bit, 32 rows for sub-32-bit dtypes.
    sub = 8 if itemsize >= 4 else 32

    if tile_n is None:
        # Aim for ~4 MiB logits block; cap so the double-buffered input block
        # stays <= ~24 MiB (safe for v7x's 64 MiB VMEM / 32 MiB scoped default).
        target_block_bytes = 4 << 20
        tile_n = max(sub, target_block_bytes // (c * itemsize))
        max_tile = max(sub, (24 << 20) // (2 * c * itemsize))
        tile_n = min(tile_n, max_tile)

    tile_n = _round_up(int(tile_n), sub)
    tile_n = min(tile_n, _round_up(n, sub))
    # Prefer >= 2 tiles when the batch allows it so the "parallel" grid axis
    # can shard across v7x's two TensorCores (no-op cost on v5e/v6e).
    if pl.cdiv(n, tile_n) < 2 and n >= 2 * sub:
        tile_n = _round_up(pl.cdiv(n, 2), sub)
    num_tiles = pl.cdiv(n, tile_n)

    # Targets as a (N, 1) int32 column; tiny, no padding needed (row mask in-kernel).
    tgt = target.astype(jnp.int32).reshape(n, 1)

    # Scoped-VMEM budget: double-buffered input block + f32 working set + slack.
    block_bytes = tile_n * c * itemsize
    f32_bytes = tile_n * c * 4
    vmem_limit = int(max(32 << 20,
                         min(64 << 20, 2 * block_bytes + 4 * f32_bytes + (2 << 20))))

    cost = pl.CostEstimate(
        flops=6 * n * c,
        transcendentals=n * c + 2 * n,
        bytes_accessed=n * c * itemsize + n * 4 + num_tiles * 128 * 4,
    )

    partials = pl.pallas_call(
        partial(_focal_loss_kernel, n_rows=n),
        out_shape=jax.ShapeDtypeStruct((num_tiles, 1, 128), jnp.float32),
        grid=(num_tiles,),
        in_specs=[
            pl.BlockSpec((tile_n, c), lambda i: (i, 0)),
            pl.BlockSpec((tile_n, 1), lambda i: (i, 0)),
        ],
        out_specs=pl.BlockSpec((1, 1, 128), lambda i: (i, 0, 0)),
        compiler_params=pltpu.CompilerParams(
            dimension_semantics=("parallel",),
            vmem_limit_bytes=vmem_limit),
        cost_estimate=cost,
    )(logits, tgt)

    # nll_loss(weight=None, reduction='mean'):  -(1/N) * sum_i focal[i, target[i]]
    return -jnp.sum(partials[:, 0, 0]) / jnp.float32(n)


def focal_loss_ref(logits, target):
    # Pure-JAX reference for validation.
    logpt = jax.nn.log_softmax(logits.astype(jnp.float32), axis=1)
    pt = jnp.exp(logpt)
    focal = ((1.0 - pt) ** GAMMA) * logpt
    picked = jnp.take_along_axis(focal, target[:, None].astype(jnp.int32), axis=1)[:, 0]
    return -jnp.mean(picked)


if __name__ == "__main__":
    key = jax.random.PRNGKey(0)
    k1, k2, k3, k4 = jax.random.split(key, 4)

    # Case 1: small classification-head shape (batch=8, classes=32), one tile.
    N1, C1 = 8, 32
    logits1 = jax.random.normal(k1, (N1, C1), dtype=jnp.float32)
    target1 = jax.random.randint(k2, (N1,), 0, C1, dtype=jnp.int32)
    loss1 = focal_loss(logits1, target1)
    jax.block_until_ready(loss1)
    ref1 = focal_loss_ref(logits1, target1)
    assert jnp.allclose(loss1, ref1, rtol=1e-5, atol=1e-5), (loss1, ref1)

    # Case 2: multi-tile grid with a masked remainder tile (N % tile_n != 0),
    # exercising the no-pad + in-kernel row-mask path.
    N2, C2 = 100, 32
    logits2 = jax.random.normal(k3, (N2, C2), dtype=jnp.float32)
    target2 = jax.random.randint(k4, (N2,), 0, C2, dtype=jnp.int32)
    loss2 = focal_loss(logits2, target2, tile_n=48)
    jax.block_until_ready(loss2)
    ref2 = focal_loss_ref(logits2, target2)
    assert jnp.allclose(loss2, ref2, rtol=1e-5, atol=1e-5), (loss2, ref2)

    print("KERNEL_OK")
</pallas_src>

<mosaic_0001>
module attributes {stable_mosaic.version = 11 : i64} {
  func.func @_focal_loss_kernel(%arg0: i32, %arg1: memref<8x32xf32, #tpu.memory_space<vmem>>, %arg2: memref<8x1xi32, #tpu.memory_space<vmem>>, %arg3: memref<1x1x128xf32, #tpu.memory_space<vmem>>) attributes {dimension_semantics = [#tpu.dimension_semantics<parallel>], iteration_bounds = array<i64: 1>, scalar_prefetch = 0 : i64, scratch_operands = 0 : i64, tpu.core_type = #tpu.core_type<tc>, window_params = [{transform_indices = @transform_0, window_bounds = array<i64: 8, 32>}, {transform_indices = @transform_1, window_bounds = array<i64: 8, 1>}, {transform_indices = @transform_2, window_bounds = array<i64: 1, 1, 128>}]} {
    %c0 = arith.constant 0 : index
    %c0_0 = arith.constant 0 : index
    %0 = vector.load %arg1[%c0, %c0_0] : memref<8x32xf32, #tpu.memory_space<vmem>>, vector<8x32xf32>
    %cst = arith.constant dense<0xFF800000> : vector<8xf32>
    %1 = vector.multi_reduction <maximumf>, %0, %cst [1] : vector<8x32xf32> to vector<8xf32>
    %2 = vector.shape_cast %1 : vector<8xf32> to vector<8x1xf32>
    %3 = vector.broadcast %2 : vector<8x1xf32> to vector<8x32xf32>
    %4 = arith.subf %0, %3 : vector<8x32xf32>
    %5 = math.exp %4 : vector<8x32xf32>
    %cst_1 = arith.constant dense<0.000000e+00> : vector<8xf32>
    %6 = vector.multi_reduction <add>, %5, %cst_1 [1] : vector<8x32xf32> to vector<8xf32>
    %7 = vector.shape_cast %6 : vector<8xf32> to vector<8x1xf32>
    %8 = math.log %7 : vector<8x1xf32>
    %9 = tpu.iota {dimensions = array<i32: 1>} : vector<1x32xi32>
    %c0_2 = arith.constant 0 : index
    %c0_3 = arith.constant 0 : index
    %10 = vector.load %arg2[%c0_2, %c0_3] : memref<8x1xi32, #tpu.memory_space<vmem>>, vector<8x1xi32>
    %11 = vector.broadcast %9 : vector<1x32xi32> to vector<8x32xi32>
    %12 = vector.broadcast %10 : vector<8x1xi32> to vector<8x32xi32>
    %13 = arith.cmpi eq, %11, %12 : vector<8x32xi32>
    %cst_4 = arith.constant 0.000000e+00 : f32
    %14 = vector.broadcast %cst_4 : f32 to vector<8x32xf32>
    %15 = arith.select %13, %4, %14 : vector<8x32xi1>, vector<8x32xf32>
    %cst_5 = arith.constant dense<0.000000e+00> : vector<8xf32>
    %16 = vector.multi_reduction <add>, %15, %cst_5 [1] : vector<8x32xf32> to vector<8xf32>
    %17 = vector.shape_cast %16 : vector<8xf32> to vector<8x1xf32>
    %18 = arith.subf %17, %8 : vector<8x1xf32>
    %19 = math.exp %18 : vector<8x1xf32>
    %cst_6 = arith.constant 1.000000e+00 : f32
    %20 = vector.broadcast %cst_6 : f32 to vector<8x1xf32>
    %21 = arith.subf %20, %19 : vector<8x1xf32>
    %22 = arith.mulf %21, %21 : vector<8x1xf32>
    %23 = arith.mulf %22, %18 : vector<8x1xf32>
    %c8_i32 = arith.constant 8 : i32
    %24 = arith.muli %arg0, %c8_i32 : i32
    %25 = tpu.iota {dimensions = array<i32: 0>} : vector<8x1xi32>
    %26 = vector.broadcast %24 : i32 to vector<8x1xi32>
    %27 = arith.addi %26, %25 : vector<8x1xi32>
    %c8_i32_7 = arith.constant 8 : i32
    %28 = vector.broadcast %c8_i32_7 : i32 to vector<8x1xi32>
    %29 = arith.cmpi slt, %27, %28 : vector<8x1xi32>
    %cst_8 = arith.constant 0.000000e+00 : f32
    %30 = vector.broadcast %cst_8 : f32 to vector<8x1xf32>
    %31 = arith.select %29, %23, %30 : vector<8x1xi1>, vector<8x1xf32>
    %32 = vector.shape_cast %31 : vector<8x1xf32> to vector<1x8x1xf32>
    %cst_9 = arith.constant dense<0.000000e+00> : vector<1xf32>
    %33 = vector.multi_reduction <add>, %32, %cst_9 [1, 2] : vector<1x8x1xf32> to vector<1xf32>
    %34 = vector.shape_cast %33 : vector<1xf32> to vector<1x1x1xf32>
    %35 = vector.extract %34[0, 0, 0] : f32 from vector<1x1x1xf32>
    %36 = vector.broadcast %35 : f32 to vector<1x1x128xf32>
    %c0_10 = arith.constant 0 : index
    %c0_11 = arith.constant 0 : index
    %c0_12 = arith.constant 0 : index
    %37 = vector.load %arg3[%c0_10, %c0_11, %c0_12] : memref<1x1x128xf32, #tpu.memory_space<vmem>>, vector<1x1x128xf32>
    tpu.vector_store %arg3[%c0_10, %c0_11, %c0_12], %36 {strides = array<i32>} : memref<1x1x128xf32, #tpu.memory_space<vmem>>, vector<1x1x128xf32>,
    return
  }
  func.func @transform_0(%arg0: i32) -> (i32, i32) {
    %c0_i32 = arith.constant 0 : i32
    %c0_i32_0 = arith.constant 0 : i32
    return %arg0, %c0_i32 : i32, i32
  }
  func.func @transform_1(%arg0: i32) -> (i32, i32) {
    %c0_i32 = arith.constant 0 : i32
    %c0_i32_0 = arith.constant 0 : i32
    return %arg0, %c0_i32 : i32, i32
  }
  func.func @transform_2(%arg0: i32) -> (i32, i32, i32) {
    %c0_i32 = arith.constant 0 : i32
    %c0_i32_0 = arith.constant 0 : i32
    %c0_i32_1 = arith.constant 0 : i32
    return %arg0, %c0_i32, %c0_i32_0 : i32, i32, i32
  }
}

</mosaic_0001>

<llo_original>
// kernel: tpu_custom_call.1
$region0: #{tpu_custom_call.1}
  #allocation0 [shape = 'u32[]', space=smem, size = 0x4, offset = 0x4, fixed_abs, tag = 'smem constant byte address 0x4 - core index']
  #allocation1 [shape = 'u32[144,128]{1,0:T(1,128)}', space=vmem, size = 0x12000, scoped, tag = 'internal scratch']
  %s0 = inlined_call_operand.vmem [shape: f32[8,32], index: 0, kind: input, shape index: {}]
  %s1 = inlined_call_operand.vmem [shape: s32[8,1], index: 1, kind: input, shape index: {}]
  %s2 = inlined_call_operand.hbm [shape: f32[1,1,128], index: 2, kind: output, shape index: {}]
  %s3 = sld [smem:[#allocation0]]
  $region18: #{tpu_custom_call.1} parent=0
    _
  %s5 = ssub.s32 1, %s3
  %s6 = scalar_select 0, %s5, %s3
  $region1: #{tpu_custom_call.1} parent=0
    #allocation2 [shape = 'u8[512]{0}', space=vmem, size = 0x400, scoped, tag = 'output window, operand 0, single buffered']
    #allocation3 [shape = 's32[1]{0}', space=sflag, size = 0x4, scoped, tag = 'scoped memory for tpu_custom_call.1']
    %7 = vsyncpa [#allocation3], 0
    // Predicated region
    $region2: #{tpu_custom_call.1} parent=1 // pred_check
      _
    $region3: #{tpu_custom_call.1} parent=1 // pred_check_branch
      %9 = sbr.rel (0) target = $region5
    $region4: #{tpu_custom_call.1} parent=1 // pred_region
      _
    $region5: #{tpu_custom_call.1} parent=1 // pred_fallthru
      _
    // Predicated region
    $region6: #{tpu_custom_call.1} parent=1 // pred_check
      _
    $region7: #{tpu_custom_call.1} parent=1 // pred_check_branch
      %11 = sbr.rel (0) target = $region9
    $region8: #{tpu_custom_call.1} parent=1 // pred_region
      _
    $region9: #{tpu_custom_call.1} parent=1 // pred_fallthru
      _
    %v12 = vld [vmem:[%s0] sm:$0xff]
    %vm13 = vcmask 261120
    %v14 = vsel %vm13, %v12, -inf
    %15 = vmax.xlane.f32.xlu0 %v14
    %v16 = vpop.xlane.xlu0 %15
    %v17 = vsub.f32 %v12, %v16
    %v18 = vmul.f32 %v17, 1.442695
    %v19 = vpow.pop %v18
    %v20 = vsel %vm13, %v19, 0.0
    %21 = vadd.xlane.f32.xlu0 %v20
    %v22 = vpop.xlane.xlu0 %21
    %v23 = vlog2.pop %v22
    %v24 = vmul.f32 %v23, 0.6931472
    %v25 = vlaneseq
    %v26 = vand.u32 %v25, 127
    %v27 = vld [vmem:[%s1] sm:$0xff]
    %28 = vset.pattern.permute.xlu0 0
    %29 = vperm.xlu0 %28, %v27
    %v30 = vpop.permute.xlu0 %29
    %vm31 = vcmp.eq.s32.totalorder %v26, %v30
    %v32 = vsel %vm31, %v17, 0.0
    %v33 = vsel %vm13, %v32, 0.0
    %34 = vadd.xlane.f32.xlu0 %v33
    %v35 = vpop.xlane.xlu0 %34
    %v36 = vsub.f32 %v35, %v24
    %v37 = vmul.f32 %v36, 1.442695
    %v38 = vpow.pop %v37
    %v39 = vsub.f32 1.0, %v38
    %v40 = vmul.f32 %v39, %v39
    %v41 = vmul.f32 %v40, %v36
    %s42 = smul.u32 0, 8
    %v43 = vlaneseq
    %v44 = vshrl.u32 %v43, 7
    %v45 = vstv %s42
    %v46 = vadd.s32 %v45, %v44
    %vm47 = vcmp.lt.s32.totalorder %v46, 8
    %v48 = vsel %vm47, %v41, 0.0
    %vm49 = vcmask 7168
    %v50 = vsel %vm49, %v48, 0.0
    %51 = vadd.xlane.f32.xlu0 %v50
    %v52 = vpop.xlane.xlu0 %51
    %v53 = vrot.slane %v52, 4
    %v54 = vadd.f32 %v52, %v53
    %v55 = vrot.slane %v54, 2
    %v56 = vadd.f32 %v54, %v55
    %v57 = vrot.slane %v56, 1
    %v58 = vadd.f32 %v56, %v57
    %s59 = vtos %v58
    %v60 = vstv %s59
    %61 = vst [vmem:[#allocation2] sm:$0x1] %v60
    // Predicated region
    $region10: #{tpu_custom_call.1} parent=1 // pred_check
      _
    $region11: #{tpu_custom_call.1} parent=1 // pred_check_branch
      %63 = sbr.rel (0) target = $region13
    $region12: #{tpu_custom_call.1} parent=1 // pred_region
      %s65 = ssub.s32 16, 16
      %66 = vsyncadd [#allocation3], %s65
      %s68 = sshll.u32 [#allocation2], 4
      %s69 = int_to_ptr.vmem [resolvable:$true] %s68
      %71 = dma.vmem_to_hbm [thread:$0]  %s69, 16, %s2, [#allocation3]
    $region13: #{tpu_custom_call.1} parent=1 // pred_fallthru
      _
    // Predicated region
    $region14: #{tpu_custom_call.1} parent=1 // pred_check
      _
    $region15: #{tpu_custom_call.1} parent=1 // pred_check_branch
      %73 = sbr.rel (0) target = $region17
    $region16: #{tpu_custom_call.1} parent=1 // pred_region
      %74 = dma.done [#allocation3], 16
    $region17: #{tpu_custom_call.1} parent=1 // pred_fallthru
      _
    %75 = vsyncpa [#allocation3], 1

</llo_original>
